<compile_context>
chip_gen: v7x
topology: tpu7x:2x2x1
jax: 0.10.0
libtpu: 0.0.40
codegen_flags: <defaults>
</compile_context>

<pallas_src>
import functools

import jax
import jax.numpy as jnp
from jax.experimental import pallas as pl
from jax.experimental.pallas import tpu as pltpu


def _round_up(x, m):
    return ((x + m - 1) // m) * m


# ---------------- fused (conv-as-matmul + bias + LayerNorm) kernels ---------------- #

def _proj_ln_kernel(p_ref, w_ref, b_ref, g_ref, beta_ref, o_ref, *, eps):
    """Fast path: single full-extent K block -> no scratch, no pl.when."""
    y = jnp.dot(p_ref[...], w_ref[...], preferred_element_type=jnp.float32)
    y = y + b_ref[...].astype(jnp.float32)                       # conv bias
    inv_e = 1.0 / y.shape[-1]
    mu = jnp.sum(y, axis=-1, keepdims=True) * inv_e               # one-pass stats
    ex2 = jnp.sum(y * y, axis=-1, keepdims=True) * inv_e
    var = ex2 - mu * mu
    scale = jax.lax.rsqrt(var + eps) * g_ref[...].astype(jnp.float32)
    o_ref[...] = ((y - mu) * scale
                  + beta_ref[...].astype(jnp.float32)).astype(o_ref.dtype)


def _proj_ln_kernel_acc(p_ref, w_ref, b_ref, g_ref, beta_ref, o_ref, acc_ref, *, eps):
    """Fallback: K tiled on grid axis 1 ('arbitrary'), f32 VMEM accumulator."""
    kk = pl.program_id(1)

    @pl.when(kk == 0)
    def _():
        acc_ref[...] = jnp.zeros_like(acc_ref)

    acc_ref[...] += jnp.dot(p_ref[...], w_ref[...],
                            preferred_element_type=jnp.float32)

    @pl.when(kk == pl.num_programs(1) - 1)
    def _():
        y = acc_ref[...] + b_ref[...].astype(jnp.float32)
        inv_e = 1.0 / y.shape[-1]
        mu = jnp.sum(y, axis=-1, keepdims=True) * inv_e
        ex2 = jnp.sum(y * y, axis=-1, keepdims=True) * inv_e
        var = ex2 - mu * mu
        scale = jax.lax.rsqrt(var + eps) * g_ref[...].astype(jnp.float32)
        o_ref[...] = ((y - mu) * scale
                      + beta_ref[...].astype(jnp.float32)).astype(o_ref.dtype)


# ------------------------------ parameter preparation ------------------------------ #

def prepare_params(raw, *, patch_size, in_chans, compute_dtype=jnp.bfloat16):
    """Hoist the (E,C,k,k) -> (K,E) transpose + bf16 cast out of the forward path."""
    E = raw["conv_w"].shape[0]
    K = in_chans * patch_size * patch_size
    w_mat = raw["conv_w"].reshape(E, K).T.astype(compute_dtype)    # (K, E)
    return {
        "w_mat": w_mat,
        "conv_b": raw["conv_b"].reshape(1, E).astype(jnp.float32),
        "ln_g": raw["ln_g"].reshape(1, E).astype(jnp.float32),
        "ln_b": raw["ln_b"].reshape(1, E).astype(jnp.float32),
    }


# --------------------------------- OverlapPatchEmbed -------------------------------- #

def overlap_patch_embed(x, params, *, patch_size, stride, eps=1e-5,
                        compute_dtype=jnp.bfloat16,
                        tm_max=512, tk_max=512, single_block_max_k=4096,
                        vmem_cap_bytes=48 * 1024 * 1024):
    """x: (B, in_chans, H, W) NCHW -> (tokens (B, Ho*Wo, E), Ho, Wo)."""
    B, C, H, W = x.shape
    k = patch_size
    pad = k // 2
    w_mat = params["w_mat"]
    K, E = w_mat.shape
    assert K == C * k * k, "prepared weight does not match (in_chans, patch_size)"

    # ---- patch extraction: efficient XLA op, already channels-major (C, kh, kw) ----
    xc = x.astype(compute_dtype)
    patches = jax.lax.conv_general_dilated_patches(
        xc, filter_shape=(k, k), window_strides=(stride, stride),
        padding=((pad, pad), (pad, pad)),
        dimension_numbers=("NCHW", "OIHW", "NHWC"),
    )                                                       # (B, Ho, Wo, C*k*k)
    _, Ho, Wo, _ = patches.shape
    M = B * Ho * Wo
    patches = patches.reshape(M, K)                          # row-major => free reshape

    # ---- M tiling: large tiles, prefer an even tile count (v7x 2-TC balance) ----
    tm = min(tm_max, _round_up(M, 8))
    m_tiles = pl.cdiv(M, tm)
    if m_tiles % 2 == 1 and tm > 8:
        m_pad0 = m_tiles * tm
        for cand in range(tm - 8, max(tm // 2, 8) - 1, -8):
            n = pl.cdiv(M, cand)
            if n % 2 == 0 and n * cand <= m_pad0:
                tm, m_tiles = cand, n
                break

    # ---- K handling: full-extent single block (no padding) when it fits VMEM ----
    use_single = K <= single_block_max_k
    if use_single:
        k_block, kt = K, 1
    else:
        K_pad = _round_up(K, 128)
        kt = pl.cdiv(K_pad, tk_max)
        k_block = _round_up(pl.cdiv(K_pad, kt), 128)
        K_pad = k_block * kt
        patches = jnp.pad(patches, ((0, 0), (0, K_pad - K)))
        w_mat = jnp.pad(w_mat, ((0, K_pad - K), (0, 0)))

    in_bytes = jnp.dtype(compute_dtype).itemsize
    out_dtype = x.dtype
    out_bytes = jnp.dtype(out_dtype).itemsize

    # ---- VMEM budget: 2x double-buffered operands + outputs (+ f32 acc) ----
    need = (2 * tm * k_block * in_bytes          # patches tiles
            + 2 * k_block * E * in_bytes         # weight tiles
            + 2 * tm * E * out_bytes             # output tiles
            + 6 * E * 4)                         # bias / gamma / beta
    if not use_single:
        need += tm * E * 4                       # accumulator scratch
    vmem_limit = int(min(max(need + (8 << 20), 32 << 20), vmem_cap_bytes))

    if use_single:
        kernel = functools.partial(_proj_ln_kernel, eps=eps)
        grid = (m_tiles,)
        in_specs = [
            pl.BlockSpec((tm, k_block), lambda i: (i, 0)),   # patches
            pl.BlockSpec((k_block, E), lambda i: (0, 0)),    # weight
            pl.BlockSpec((1, E), lambda i: (0, 0)),          # conv bias
            pl.BlockSpec((1, E), lambda i: (0, 0)),          # LN gamma
            pl.BlockSpec((1, E), lambda i: (0, 0)),          # LN beta
        ]
        out_specs = pl.BlockSpec((tm, E), lambda i: (i, 0))
        scratch = []
        dims = ("parallel",)
    else:
        kernel = functools.partial(_proj_ln_kernel_acc, eps=eps)
        grid = (m_tiles, kt)
        in_specs = [
            pl.BlockSpec((tm, k_block), lambda i, j: (i, j)),
            pl.BlockSpec((k_block, E), lambda i, j: (j, 0)),
            pl.BlockSpec((1, E), lambda i, j: (0, 0)),
            pl.BlockSpec((1, E), lambda i, j: (0, 0)),
            pl.BlockSpec((1, E), lambda i, j: (0, 0)),
        ]
        out_specs = pl.BlockSpec((tm, E), lambda i, j: (i, 0))
        scratch = [pltpu.VMEM((tm, E), jnp.float32)]
        dims = ("parallel", "arbitrary")

    out = pl.pallas_call(
        kernel,
        grid_spec=pltpu.PrefetchScalarGridSpec(
            num_scalar_prefetch=0,
            grid=grid,
            in_specs=in_specs,
            out_specs=out_specs,
            scratch_shapes=scratch,
        ),
        out_shape=jax.ShapeDtypeStruct((M, E), out_dtype),
        compiler_params=pltpu.CompilerParams(
            dimension_semantics=dims,
            vmem_limit_bytes=vmem_limit,
        ),
    )(patches, w_mat, params["conv_b"], params["ln_g"], params["ln_b"])

    tokens = out.reshape(B, Ho * Wo, E)
    return tokens, Ho, Wo


# --------------------------------------- Reference ---------------------------------- #

def overlap_patch_embed_ref(x, raw, *, patch_size, stride, eps=1e-5):
    pad = patch_size // 2
    y = jax.lax.conv_general_dilated(
        x, raw["conv_w"],
        window_strides=(stride, stride),
        padding=((pad, pad), (pad, pad)),
        dimension_numbers=("NCHW", "OIHW", "NCHW"),
    ) + raw["conv_b"][None, :, None, None]
    B, E, Ho, Wo = y.shape
    y = y.reshape(B, E, Ho * Wo).transpose(0, 2, 1)          # (B, N, E)
    mu = y.mean(-1, keepdims=True)
    var = ((y - mu) ** 2).mean(-1, keepdims=True)
    y_hat = (y - mu) / jnp.sqrt(var + eps)
    return y_hat * raw["ln_g"] + raw["ln_b"], Ho, Wo


# ------------------------------------------ Main ------------------------------------ #

if __name__ == "__main__":
    # Small shapes consistent with the module: img 16x16, patch 7, stride 4.
    batch, in_chans, img = 2, 3, 16
    patch_size, stride = 7, 4
    embed_dim = 64

    key = jax.random.PRNGKey(0)
    kx, kw, kb, kg, kbb = jax.random.split(key, 5)

    x = jax.random.normal(kx, (batch, in_chans, img, img), dtype=jnp.float32)

    fan_out = patch_size * patch_size * embed_dim
    raw = {
        "conv_w": jax.random.normal(
            kw, (embed_dim, in_chans, patch_size, patch_size), jnp.float32)
        * (2.0 / fan_out) ** 0.5,
        "conv_b": jax.random.normal(kb, (embed_dim,), jnp.float32) * 0.01,
        "ln_g": 1.0 + 0.1 * jax.random.normal(kg, (embed_dim,), jnp.float32),
        "ln_b": 0.1 * jax.random.normal(kbb, (embed_dim,), jnp.float32),
    }
    params = prepare_params(raw, patch_size=patch_size, in_chans=in_chans)

    ref, Ho_r, Wo_r = overlap_patch_embed_ref(
        x, raw, patch_size=patch_size, stride=stride)

    # Fast path: single full-extent K block (no scratch, no K padding).
    tokens, Ho, Wo = overlap_patch_embed(
        x, params, patch_size=patch_size, stride=stride)
    tokens = jax.block_until_ready(tokens)
    assert (Ho, Wo) == (Ho_r, Wo_r)
    assert tokens.shape == (batch, Ho * Wo, embed_dim)
    # bf16 operand streams (f32 accumulation) -> looser tolerance than pure f32.
    assert jnp.allclose(tokens, ref, atol=2e-2, rtol=2e-2), "fast path mismatch"

    # K-tiled fallback path (forced) to exercise the accumulator kernel as well.
    tokens2, Ho2, Wo2 = overlap_patch_embed(
        x, params, patch_size=patch_size, stride=stride,
        single_block_max_k=0, tk_max=128)
    tokens2 = jax.block_until_ready(tokens2)
    assert (Ho2, Wo2) == (Ho_r, Wo_r)
    assert jnp.allclose(tokens2, ref, atol=2e-2, rtol=2e-2), "K-tiled path mismatch"

    print("KERNEL_OK")
</pallas_src>

<mosaic_0001>
module attributes {stable_mosaic.version = 11 : i64} {
  func.func @_proj_ln_kernel(%arg0: i32, %arg1: memref<16x147xbf16, #tpu.memory_space<vmem>>, %arg2: memref<147x64xbf16, #tpu.memory_space<vmem>>, %arg3: memref<1x64xf32, #tpu.memory_space<vmem>>, %arg4: memref<1x64xf32, #tpu.memory_space<vmem>>, %arg5: memref<1x64xf32, #tpu.memory_space<vmem>>, %arg6: memref<16x64xf32, #tpu.memory_space<vmem>>) attributes {dimension_semantics = [#tpu.dimension_semantics<parallel>], iteration_bounds = array<i64: 2>, scalar_prefetch = 0 : i64, scratch_operands = 0 : i64, tpu.core_type = #tpu.core_type<tc>, window_params = [{transform_indices = @transform_0, window_bounds = array<i64: 16, 147>}, {pipeline_mode = #tpu.pipeline_mode<synchronous>, transform_indices = @transform_1, window_bounds = array<i64: 147, 64>}, {pipeline_mode = #tpu.pipeline_mode<synchronous>, transform_indices = @transform_2, window_bounds = array<i64: 1, 64>}, {pipeline_mode = #tpu.pipeline_mode<synchronous>, transform_indices = @transform_3, window_bounds = array<i64: 1, 64>}, {pipeline_mode = #tpu.pipeline_mode<synchronous>, transform_indices = @transform_4, window_bounds = array<i64: 1, 64>}, {transform_indices = @transform_5, window_bounds = array<i64: 16, 64>}]} {
    %c0 = arith.constant 0 : index
    %c0_0 = arith.constant 0 : index
    %0 = vector.load %arg1[%c0, %c0_0] : memref<16x147xbf16, #tpu.memory_space<vmem>>, vector<16x147xbf16>
    %c0_1 = arith.constant 0 : index
    %c0_2 = arith.constant 0 : index
    %1 = vector.load %arg2[%c0_1, %c0_2] : memref<147x64xbf16, #tpu.memory_space<vmem>>, vector<147x64xbf16>
    %cst = arith.constant dense<0.000000e+00> : vector<16x64xf32>
    %2 = tpu.matmul %0, %1, %cst {dimension_numbers = #tpu.dot_dimension_numbers<[1], [0], [0], [1], [0, 0, 1, 1], [], []>} : vector<16x147xbf16>, vector<147x64xbf16>, vector<16x64xf32> -> vector<16x64xf32>
    %c0_3 = arith.constant 0 : index
    %c0_4 = arith.constant 0 : index
    %3 = vector.load %arg3[%c0_3, %c0_4] : memref<1x64xf32, #tpu.memory_space<vmem>>, vector<1x64xf32>
    %4 = vector.broadcast %3 : vector<1x64xf32> to vector<16x64xf32>
    %5 = arith.addf %2, %4 : vector<16x64xf32>
    %cst_5 = arith.constant dense<0.000000e+00> : vector<16xf32>
    %6 = vector.multi_reduction <add>, %5, %cst_5 [1] : vector<16x64xf32> to vector<16xf32>
    %7 = vector.shape_cast %6 : vector<16xf32> to vector<16x1xf32>
    %cst_6 = arith.constant 1.562500e-02 : f32
    %8 = vector.broadcast %cst_6 : f32 to vector<16x1xf32>
    %9 = arith.mulf %7, %8 : vector<16x1xf32>
    %10 = arith.mulf %5, %5 : vector<16x64xf32>
    %cst_7 = arith.constant dense<0.000000e+00> : vector<16xf32>
    %11 = vector.multi_reduction <add>, %10, %cst_7 [1] : vector<16x64xf32> to vector<16xf32>
    %12 = vector.shape_cast %11 : vector<16xf32> to vector<16x1xf32>
    %cst_8 = arith.constant 1.562500e-02 : f32
    %13 = vector.broadcast %cst_8 : f32 to vector<16x1xf32>
    %14 = arith.mulf %12, %13 : vector<16x1xf32>
    %15 = arith.mulf %9, %9 : vector<16x1xf32>
    %16 = arith.subf %14, %15 : vector<16x1xf32>
    %cst_9 = arith.constant 9.99999974E-6 : f32
    %17 = vector.broadcast %cst_9 : f32 to vector<16x1xf32>
    %18 = arith.addf %16, %17 : vector<16x1xf32>
    %19 = math.rsqrt %18 : vector<16x1xf32>
    %c0_10 = arith.constant 0 : index
    %c0_11 = arith.constant 0 : index
    %20 = vector.load %arg4[%c0_10, %c0_11] : memref<1x64xf32, #tpu.memory_space<vmem>>, vector<1x64xf32>
    %21 = vector.broadcast %19 : vector<16x1xf32> to vector<16x64xf32>
    %22 = vector.broadcast %20 : vector<1x64xf32> to vector<16x64xf32>
    %23 = arith.mulf %21, %22 : vector<16x64xf32>
    %24 = vector.broadcast %9 : vector<16x1xf32> to vector<16x64xf32>
    %25 = arith.subf %5, %24 : vector<16x64xf32>
    %26 = arith.mulf %25, %23 : vector<16x64xf32>
    %c0_12 = arith.constant 0 : index
    %c0_13 = arith.constant 0 : index
    %27 = vector.load %arg5[%c0_12, %c0_13] : memref<1x64xf32, #tpu.memory_space<vmem>>, vector<1x64xf32>
    %28 = vector.broadcast %27 : vector<1x64xf32> to vector<16x64xf32>
    %29 = arith.addf %26, %28 : vector<16x64xf32>
    %c0_14 = arith.constant 0 : index
    %c0_15 = arith.constant 0 : index
    %30 = vector.load %arg6[%c0_14, %c0_15] : memref<16x64xf32, #tpu.memory_space<vmem>>, vector<16x64xf32>
    tpu.vector_store %arg6[%c0_14, %c0_15], %29 {strides = array<i32>} : memref<16x64xf32, #tpu.memory_space<vmem>>, vector<16x64xf32>,
    return
  }
  func.func @transform_0(%arg0: i32) -> (i32, i32) {
    %c0_i32 = arith.constant 0 : i32
    %c0_i32_0 = arith.constant 0 : i32
    return %arg0, %c0_i32 : i32, i32
  }
  func.func @transform_1(%arg0: i32) -> (i32, i32) {
    %c0_i32 = arith.constant 0 : i32
    %c0_i32_0 = arith.constant 0 : i32
    %c0_i32_1 = arith.constant 0 : i32
    return %c0_i32, %c0_i32_0 : i32, i32
  }
  func.func @transform_2(%arg0: i32) -> (i32, i32) {
    %c0_i32 = arith.constant 0 : i32
    %c0_i32_0 = arith.constant 0 : i32
    %c0_i32_1 = arith.constant 0 : i32
    return %c0_i32, %c0_i32_0 : i32, i32
  }
  func.func @transform_3(%arg0: i32) -> (i32, i32) {
    %c0_i32 = arith.constant 0 : i32
    %c0_i32_0 = arith.constant 0 : i32
    %c0_i32_1 = arith.constant 0 : i32
    return %c0_i32, %c0_i32_0 : i32, i32
  }
  func.func @transform_4(%arg0: i32) -> (i32, i32) {
    %c0_i32 = arith.constant 0 : i32
    %c0_i32_0 = arith.constant 0 : i32
    %c0_i32_1 = arith.constant 0 : i32
    return %c0_i32, %c0_i32_0 : i32, i32
  }
  func.func @transform_5(%arg0: i32) -> (i32, i32) {
    %c0_i32 = arith.constant 0 : i32
    %c0_i32_0 = arith.constant 0 : i32
    return %arg0, %c0_i32 : i32, i32
  }
}

</mosaic_0001>

<llo_original>
// kernel: tpu_custom_call.1
$region0: #{tpu_custom_call.1}
  #allocation0 [shape = 'u32[]', space=smem, size = 0x4, offset = 0x4, fixed_abs, tag = 'smem constant byte address 0x4 - core index']
  #allocation1 [shape = 'u32[144,128]{1,0:T(1,128)}', space=vmem, size = 0x12000, scoped, tag = 'internal scratch']
  %s0 = inlined_call_operand.vmem [shape: bf16[32,147], index: 0, kind: input, shape index: {}]
  %s1 = inlined_call_operand.vmem [shape: bf16[147,64], index: 1, kind: input, shape index: {}]
  %s2 = inlined_call_operand.vmem [shape: f32[1,64], index: 2, kind: input, shape index: {}]
  %s3 = inlined_call_operand.vmem [shape: f32[1,64], index: 3, kind: input, shape index: {}]
  %s4 = inlined_call_operand.vmem [shape: f32[1,64], index: 4, kind: input, shape index: {}]
  %s5 = inlined_call_operand.hbm [shape: f32[32,64], index: 5, kind: output, shape index: {}]
  %s6 = sld [smem:[#allocation0]]
  $region53: #{tpu_custom_call.1} parent=0
    _
  %s8 = ssub.s32 1, %s6
  %s9 = scalar_select 0, %s8, %s6
  $region1: #{tpu_custom_call.1} parent=0
    #allocation2 [shape = 'u8[16384]{0}', space=vmem, size = 0x4000, scoped, tag = 'output window, operand 0']
    #allocation3 [shape = 's32[2]{0}', space=sflag, size = 0x8, scoped, tag = 'scoped memory for tpu_custom_call.1']
    %10 = vsyncpa [#allocation3], 0
    %s11 = scalar_lea.sflag [#allocation3], 1
    %12 = vsyncpa %s11, 0
    loop: start=0, step=1, limit=4
    $region2: #{tpu_custom_call.1} parent=1 // loop_pre_header
      _
    $region3: #{tpu_custom_call.1} parent=1 // loop_header
      %s14 = sphi 0, %s18
      %p15 = scmp.ge.s32.totalorder %s14, 4
      %s24 = sphi 0, %s26
      %s27 = sphi 0, %s24
      %s28 = sphi 0, %s27
      %s44 = sphi 0, %s28
      %s48 = sphi 0, %s48
      %s50 = sphi 0, %s48
      %s51 = sphi 0, %s50
      %s65 = sphi 0, %s51
      %s69 = sphi 0, %s69
      %s71 = sphi 0, %s69
      %s72 = sphi 0, %s71
      %s86 = sphi 0, %s72
      %s90 = sphi 0, %s90
      %s92 = sphi 0, %s90
      %s93 = sphi 0, %s92
      %s107 = sphi 0, %s93
      %s111 = sphi 0, %s111
      %s113 = sphi 0, %s111
      %s114 = sphi 0, %s113
      %s128 = sphi 0, %s114
      %s134 = sphi 0, %s136
      %s137 = sphi 0, %s134
      %s138 = sphi 0, %s137
      %s154 = sphi 0, %s138
    $region4: #{tpu_custom_call.1} parent=1 // loop_header_branch
      %17 = sbr.rel (%p15) target = $region8
    $region5: #{tpu_custom_call.1} parent=1 // loop_body
      %s19 = ssub.s32 %s14, 1
      %s20 = ssub.s32 %s14, 2
      %s21 = sadd.s32 %s14, 1
      %s22 = ssub.s32 %s14, %s21
      %p23 = scmp.eq.s32.totalorder %s22, 0
      %s25 = sadd.s32 %s24, 1
      %s26 = scalar_select %p23, %s24, %s25
      %p29 = pneg %p23
      %p30 = scmp.eq.s32.totalorder %s14, 1
      %p31 = por %p29, %p30
      %p32 = scmp.ne.s32.totalorder %s24, %s27
      %p33 = scmp.eq.s32.totalorder %s14, 0
      %p34 = por %p32, %p33
      %p35 = scmp.ne.s32.totalorder %s24, %s27
      %p36 = scmp.eq.s32.totalorder %s19, 1
      %p37 = por %p35, %p36
      %p38 = scmp.ne.s32.totalorder %s27, %s28
      %p39 = scmp.eq.s32.totalorder %s19, 0
      %p40 = por %p38, %p39
      %p41 = scmp.ne.s32.totalorder %s27, %s28
      %p42 = scmp.eq.s32.totalorder %s20, 1
      %p43 = por %p41, %p42
      %p45 = scmp.ne.s32.totalorder %s28, %s44
      %p46 = scmp.eq.s32.totalorder %s20, 0
      %p47 = por %p45, %p46
      %s49 = sadd.s32 %s48, 1
      %p52 = scmp.eq.s32.totalorder %s14, 1
      %p53 = scmp.ne.s32.totalorder %s48, %s50
      %p54 = scmp.eq.s32.totalorder %s14, 0
      %p55 = por %p53, %p54
      %p56 = scmp.ne.s32.totalorder %s48, %s50
      %p57 = scmp.eq.s32.totalorder %s19, 1
      %p58 = por %p56, %p57
      %p59 = scmp.ne.s32.totalorder %s50, %s51
      %p60 = scmp.eq.s32.totalorder %s19, 0
      %p61 = por %p59, %p60
      %p62 = scmp.ne.s32.totalorder %s50, %s51
      %p63 = scmp.eq.s32.totalorder %s20, 1
      %p64 = por %p62, %p63
      %p66 = scmp.ne.s32.totalorder %s51, %s65
      %p67 = scmp.eq.s32.totalorder %s20, 0
      %p68 = por %p66, %p67
      %s70 = sadd.s32 %s69, 1
      %p73 = scmp.eq.s32.totalorder %s14, 1
      %p74 = scmp.ne.s32.totalorder %s69, %s71
      %p75 = scmp.eq.s32.totalorder %s14, 0
      %p76 = por %p74, %p75
      %p77 = scmp.ne.s32.totalorder %s69, %s71
      %p78 = scmp.eq.s32.totalorder %s19, 1
      %p79 = por %p77, %p78
      %p80 = scmp.ne.s32.totalorder %s71, %s72
      %p81 = scmp.eq.s32.totalorder %s19, 0
      %p82 = por %p80, %p81
      %p83 = scmp.ne.s32.totalorder %s71, %s72
      %p84 = scmp.eq.s32.totalorder %s20, 1
      %p85 = por %p83, %p84
      %p87 = scmp.ne.s32.totalorder %s72, %s86
      %p88 = scmp.eq.s32.totalorder %s20, 0
      %p89 = por %p87, %p88
      %s91 = sadd.s32 %s90, 1
      %p94 = scmp.eq.s32.totalorder %s14, 1
      %p95 = scmp.ne.s32.totalorder %s90, %s92
      %p96 = scmp.eq.s32.totalorder %s14, 0
      %p97 = por %p95, %p96
      %p98 = scmp.ne.s32.totalorder %s90, %s92
      %p99 = scmp.eq.s32.totalorder %s19, 1
      %p100 = por %p98, %p99
      %p101 = scmp.ne.s32.totalorder %s92, %s93
      %p102 = scmp.eq.s32.totalorder %s19, 0
      %p103 = por %p101, %p102
      %p104 = scmp.ne.s32.totalorder %s92, %s93
      %p105 = scmp.eq.s32.totalorder %s20, 1
      %p106 = por %p104, %p105
      %p108 = scmp.ne.s32.totalorder %s93, %s107
      %p109 = scmp.eq.s32.totalorder %s20, 0
      %p110 = por %p108, %p109
      %s112 = sadd.s32 %s111, 1
      %p115 = scmp.eq.s32.totalorder %s14, 1
      %p116 = scmp.ne.s32.totalorder %s111, %s113
      %p117 = scmp.eq.s32.totalorder %s14, 0
      %p118 = por %p116, %p117
      %p119 = scmp.ne.s32.totalorder %s111, %s113
      %p120 = scmp.eq.s32.totalorder %s19, 1
      %p121 = por %p119, %p120
      %p122 = scmp.ne.s32.totalorder %s113, %s114
      %p123 = scmp.eq.s32.totalorder %s19, 0
      %p124 = por %p122, %p123
      %p125 = scmp.ne.s32.totalorder %s113, %s114
      %p126 = scmp.eq.s32.totalorder %s20, 1
      %p127 = por %p125, %p126
      %p129 = scmp.ne.s32.totalorder %s114, %s128
      %p130 = scmp.eq.s32.totalorder %s20, 0
      %p131 = por %p129, %p130
      %s132 = ssub.s32 %s14, %s21
      %p133 = scmp.eq.s32.totalorder %s132, 0
      %s135 = sadd.s32 %s134, 1
      %s136 = scalar_select %p133, %s134, %s135
      %p139 = pneg %p133
      %p140 = scmp.eq.s32.totalorder %s14, 1
      %p141 = por %p139, %p140
      %p142 = scmp.ne.s32.totalorder %s134, %s137
      %p143 = scmp.eq.s32.totalorder %s14, 0
      %p144 = por %p142, %p143
      %p145 = scmp.ne.s32.totalorder %s134, %s137
      %p146 = scmp.eq.s32.totalorder %s19, 1
      %p147 = por %p145, %p146
      %p148 = scmp.ne.s32.totalorder %s137, %s138
      %p149 = scmp.eq.s32.totalorder %s19, 0
      %p150 = por %p148, %p149
      %p151 = scmp.ne.s32.totalorder %s137, %s138
      %p152 = scmp.eq.s32.totalorder %s20, 1
      %p153 = por %p151, %p152
      %p155 = scmp.ne.s32.totalorder %s138, %s154
      %p156 = scmp.eq.s32.totalorder %s20, 0
      %p157 = por %p155, %p156
      %p158 = scmp.le.s32.totalorder 1, %s14
      %p159 = scmp.lt.s32.totalorder %s14, 3
      %p160 = pnand %p158, %p159
      %p161 = pneg %p160
      // Predicated region
      $region9: #{tpu_custom_call.1} parent=5 // pred_check
        _
      $region10: #{tpu_custom_call.1} parent=5 // pred_check_branch
        %163 = sbr.rel (%p160) target = $region12
      $region11: #{tpu_custom_call.1} parent=5 // pred_region
        %s164 = ssub.s32 %s14, 1
        // Predicated region
        $region13: #{tpu_custom_call.1} parent=11 // pred_check
          %p165 = pneg %p61
        $region14: #{tpu_custom_call.1} parent=11 // pred_check_branch
          %167 = sbr.rel (%p165) target = $region16
        $region15: #{tpu_custom_call.1} parent=11 // pred_region
          _
        $region16: #{tpu_custom_call.1} parent=11 // pred_fallthru
          _
        // Predicated region
        $region17: #{tpu_custom_call.1} parent=11 // pred_check
          %p168 = pneg %p82
        $region18: #{tpu_custom_call.1} parent=11 // pred_check_branch
          %170 = sbr.rel (%p168) target = $region20
        $region19: #{tpu_custom_call.1} parent=11 // pred_region
          _
        $region20: #{tpu_custom_call.1} parent=11 // pred_fallthru
          _
        // Predicated region
        $region21: #{tpu_custom_call.1} parent=11 // pred_check
          %p171 = pneg %p103
        $region22: #{tpu_custom_call.1} parent=11 // pred_check_branch
          %173 = sbr.rel (%p171) target = $region24
        $region23: #{tpu_custom_call.1} parent=11 // pred_region
          _
        $region24: #{tpu_custom_call.1} parent=11 // pred_fallthru
          _
        // Predicated region
        $region25: #{tpu_custom_call.1} parent=11 // pred_check
          %p174 = pneg %p124
        $region26: #{tpu_custom_call.1} parent=11 // pred_check_branch
          %176 = sbr.rel (%p174) target = $region28
        $region27: #{tpu_custom_call.1} parent=11 // pred_region
          _
        $region28: #{tpu_custom_call.1} parent=11 // pred_fallthru
          _
      $region12: #{tpu_custom_call.1} parent=5 // pred_fallthru
        _
      %p177 = scmp.lt.s32.totalorder %s14, 2
      // Predicated region
      $region29: #{tpu_custom_call.1} parent=5 // pred_check
        %p178 = pneg %p177
      $region30: #{tpu_custom_call.1} parent=5 // pred_check_branch
        %180 = sbr.rel (%p178) target = $region32
      $region31: #{tpu_custom_call.1} parent=5 // pred_region
        // Predicated region
        $region33: #{tpu_custom_call.1} parent=31 // pred_check
          %p181 = pneg %p34
        $region34: #{tpu_custom_call.1} parent=31 // pred_check_branch
          %183 = sbr.rel (%p181) target = $region36
        $region35: #{tpu_custom_call.1} parent=31 // pred_region
          %s184 = smul.u32 2, %s14
          %p185 = scmp.lt.s32.totalorder %s184, 3
          %s186 = scalar_select %p185, %s184, 3
          %s187 = smul.addr %s186, 2
          %s188 = smul.addr %s187, 4
          %s189 = scalar_lea.vmem %s0, %s188
          %s190 = smul.u32 2, %s14
        $region36: #{tpu_custom_call.1} parent=31 // pred_fallthru
          _
      $region32: #{tpu_custom_call.1} parent=5 // pred_fallthru
        _
      %p191 = scmp.le.s32.totalorder 1, %s14
      %p192 = scmp.lt.s32.totalorder %s14, 3
      %p193 = pnand %p191, %p192
      %p194 = pneg %p193
      // Predicated region
      $region37: #{tpu_custom_call.1} parent=5 // pred_check
        _
      $region38: #{tpu_custom_call.1} parent=5 // pred_check_branch
        %196 = sbr.rel (%p193) target = $region40
      $region39: #{tpu_custom_call.1} parent=5 // pred_region
        %s197 = ssub.s32 %s14, 1
        %s198 = smul.u32 2, %s19
        %p199 = scmp.lt.s32.totalorder %s198, 3
        %s200 = scalar_select %p199, %s198, 3
        %s201 = smul.addr %s200, 2
        %s202 = smul.addr %s201, 4
        %s203 = scalar_lea.vmem %s0, %s202
        %p204 = pneg %p40
        %p205 = pneg %p37
        %p206 = pneg %p61
        %p207 = pneg %p58
        %p208 = pneg %p82
        %p209 = pneg %p79
        %p210 = pneg %p103
        %p211 = pneg %p100
        %p212 = pneg %p124
        %p213 = pneg %p121
        %p214 = pneg %p150
        %p215 = pneg %p147
        %s216 = sand.u32 %s137, 1
        %s217 = scalar_lea.sflag [#allocation3], %s216
        %s218 = sand.u32 %s137, 1
        %s219 = smul.addr %s218, 16
        %s220 = scalar_lea.vmem [#allocation2], %s219
        %s221 = smul.u32 2, %s19
        %p222 = scmp.lt.s32.totalorder %s221, 3
        %s223 = scalar_select %p222, %s221, 3
        %s224 = smul.addr %s223, 2
        %s225 = smul.addr %s224, 4
        %s226 = scalar_lea.vmem %s0, %s225
        %s227 = smul.u32 2, %s19
        %s228 = smul.u32 2, %s19
        %v230 = vld [vmem:[%s226] sm:$0xff]
        %v231 = vld [vmem:[%s226 + $0x8] sm:$0xff]
        %v232 = vld [vmem:[%s1] sm:$0xf]
        %v233 = vld [vmem:[%s1 + $0x4] sm:$0xf]
        %v234 = vld [vmem:[%s1 + $0x8] sm:$0xf]
        %v235 = vld [vmem:[%s1 + $0xc] sm:$0xf]
        %v236 = vld [vmem:[%s1 + $0x10] sm:$0xf]
        %v237 = vld [vmem:[%s1 + $0x14] sm:$0xf]
        %v238 = vld [vmem:[%s1 + $0x18] sm:$0xf]
        %v239 = vld [vmem:[%s1 + $0x1c] sm:$0xf]
        %v240 = vld [vmem:[%s1 + $0x20] sm:$0xf]
        %v241 = vld [vmem:[%s1 + $0x24] sm:$0xf]
        %v242 = vld [vmem:[%s1 + $0x28] sm:$0xf]
        %v243 = vld [vmem:[%s1 + $0x2c] sm:$0xf]
        %v244 = vld [vmem:[%s1 + $0x30] sm:$0xf]
        %v245 = vld [vmem:[%s1 + $0x34] sm:$0xf]
        %v246 = vld [vmem:[%s1 + $0x38] sm:$0xf]
        %v247 = vld [vmem:[%s1 + $0x3c] sm:$0xf]
        %v248 = vld [vmem:[%s1 + $0x40] sm:$0xf]
        %v249 = vld [vmem:[%s1 + $0x44] sm:$0xf]
        %v250 = vld [vmem:[%s1 + $0x48] sm:$0x3]
        %v251 = vld [vmem:[%s2] sm:$0x1]
        %v253 = vlaneseq
        %v254 = vshrl.u32 %v253, 7
        %v255 = vsub.s32 0, %v254
        %v256 = vrot.slane %v251, %v255
        %v260 = vunpack.c.l.b16 %v230
        %v261 = vunpack.c.h.b16 %v230
        %v262 = vunpack.c.l.b16 %v231
        %v263 = vunpack.c.h.b16 %v231
        %v264 = vpack.c.b16 %v262, %v260
        %v265 = vpack.c.b16 %v263, %v261
        %v286 = vunpack.c.l.b16 %v232
        %v287 = vunpack.c.l.b16 %v233
        %v288 = vunpack.c.l.b16 %v234
        %v289 = vunpack.c.l.b16 %v235
        %v290 = vunpack.c.l.b16 %v236
        %v291 = vunpack.c.l.b16 %v237
        %v292 = vunpack.c.l.b16 %v238
        %v293 = vunpack.c.l.b16 %v239
        %v294 = vunpack.c.l.b16 %v240
        %v295 = vunpack.c.l.b16 %v241
        %v296 = vunpack.c.l.b16 %v242
        %v297 = vunpack.c.l.b16 %v243
        %v298 = vunpack.c.l.b16 %v244
        %v299 = vunpack.c.l.b16 %v245
        %v300 = vunpack.c.l.b16 %v246
        %v301 = vunpack.c.l.b16 %v247
        %v302 = vunpack.c.l.b16 %v248
        %v303 = vunpack.c.l.b16 %v249
        %v304 = vunpack.c.l.b16 %v250
        %v305 = vpack.c.b16 %v287, %v286
        %v306 = vpack.c.b16 %v289, %v288
        %v307 = vpack.c.b16 %v291, %v290
        %v308 = vpack.c.b16 %v293, %v292
        %v309 = vpack.c.b16 %v295, %v294
        %v310 = vpack.c.b16 %v297, %v296
        %v311 = vpack.c.b16 %v299, %v298
        %v312 = vpack.c.b16 %v301, %v300
        %v313 = vpack.c.b16 %v303, %v302
        %v314 = vpack.c.b16 %v304, %v304
        %vm324 = vcmask 154624
        %v326 = vsel %vm324, %v265, 0
        %vm328 = vcmask 1040384
        %vm329 = vcmask 1041408
        %v330 = vsel %vm328, 4294967295, 65535
        %v331 = vsel %vm329, %v330, 0
        %v333 = vand.u32 %v314, %v331
        %335 = vmatprep.subr.bf16.mxu0 0
        %336 = vmatpush1.bf16.msra.mxu0 %v305
        %337 = vmatprep.subr.bf16.mxu0 0
        %338 = vmatpush1.bf16.msra.mxu0 %v306
        %339 = vmatprep.subr.bf16.mxu0 0
        %340 = vmatpush1.bf16.msra.mxu0 %v307
        %341 = vmatprep.subr.bf16.mxu0 0
        %342 = vmatpush1.bf16.msra.mxu0 %v308
        %343 = vmatprep.subr.bf16.mxu0 0
        %344 = vmatpush1.bf16.msra.mxu0 %v309
        %345 = vmatprep.subr.bf16.mxu0 0
        %346 = vmatpush1.bf16.msra.mxu0 %v310
        %347 = vmatprep.subr.bf16.mxu0 0
        %348 = vmatpush1.bf16.msra.mxu0 %v311
        %349 = vmatprep.subr.bf16.mxu0 0
        %350 = vmatpush1.bf16.msra.mxu0 %v312
        %351 = vmatprep.subr.bf16.mxu0 0
        %352 = vmatpush1.bf16.msra.mxu0 %v313
        %353 = vmatprep.subr.bf16.mxu0 0
        %354 = vmatpush1.bf16.msra.mxu0 %v333
        %355 = vmatprep.subr.bf16.mxu0 0
        %356 = vmatpush1.bf16.msra.mxu0 0
        %357 = vmatprep.subr.bf16.mxu0 0
        %358 = vmatpush1.bf16.msra.mxu0 0
        %359 = vmatprep.subr.bf16.mxu0 0
        %360 = vmatpush1.bf16.msra.mxu0 0
        %361 = vmatprep.subr.bf16.mxu0 0
        %362 = vmatpush1.bf16.msra.mxu0 0
        %363 = vmatprep.subr.bf16.mxu0 0
        %364 = vmatpush1.bf16.msra.mxu0 0
        %365 = vmatprep.subr.bf16.mxu0 0
        %366 = vmatpush1.bf16.msra.mxu0 0
        %367 = vmatprep.mubr.bf16.mxu0 %v326
        %368 = vmatmul.mubr.bf16.gmra.mrb[0].mxu0 %v264
        %v369 = vpop.f32.mrb[0].mxu0
        %v370 = vadd.f32 %v256, %v369
        %v371 = vpop.f32.mrb[0].mxu0
        %v372 = vpop.f32.mrb[0].mxu0
        %v373 = vadd.f32 %v256, %v372
        %v374 = vpop.f32.mrb[0].mxu0
        %375 = vdwg.mxu0
        %vm376 = vcmask 523264
        %v377 = vsel %vm376, %v370, 0.0
        %378 = vadd.xlane.f32.xlu0 %v377
        %v379 = vpop.xlane.xlu0 %378
        %v380 = vsel %vm376, %v373, 0.0
        %381 = vadd.xlane.f32.xlu0 %v380
        %v382 = vpop.xlane.xlu0 %381
        %v383 = vmul.f32 %v379, 0.015625
        %v384 = vmul.f32 %v382, 0.015625
        %v385 = vmul.f32 %v370, %v370
        %v386 = vmul.f32 %v373, %v373
        %v387 = vsel %vm376, %v385, 0.0
        %388 = vadd.xlane.f32.xlu0 %v387
        %v389 = vpop.xlane.xlu0 %388
        %v390 = vsel %vm376, %v386, 0.0
        %391 = vadd.xlane.f32.xlu0 %v390
        %v392 = vpop.xlane.xlu0 %391
        %v393 = vmul.f32 %v389, 0.015625
        %v394 = vmul.f32 %v392, 0.015625
        %v395 = vmul.f32 %v383, %v383
        %v396 = vmul.f32 %v384, %v384
        %v397 = vsub.f32 %v393, %v395
        %v398 = vsub.f32 %v394, %v396
        %v399 = vadd.f32 %v397, 1e-05
        %v400 = vadd.f32 %v398, 1e-05
        %v401 = vrsqrt.pop %v399
        %v402 = vrsqrt.pop %v400
        %v403 = vld [vmem:[%s3] sm:$0x1]
        %v405 = vlaneseq
        %v406 = vshrl.u32 %v405, 7
        %v407 = vsub.s32 0, %v406
        %v408 = vrot.slane %v403, %v407
        %v410 = vmul.f32 %v401, %v408
        %v411 = vmul.f32 %v402, %v408
        %v412 = vsub.f32 %v370, %v383
        %v413 = vsub.f32 %v373, %v384
        %v414 = vmul.f32 %v412, %v410
        %v415 = vmul.f32 %v413, %v411
        %v416 = vld [vmem:[%s4] sm:$0x1]
        %v418 = vlaneseq
        %v419 = vshrl.u32 %v418, 7
        %v420 = vsub.s32 0, %v419
        %v421 = vrot.slane %v416, %v420
        %v423 = vadd.f32 %v414, %v421
        %v424 = vadd.f32 %v415, %v421
        %425 = vst.msk [vmem:[%s220] sm:$0xff] %vm376, %v423
        %426 = vst.msk [vmem:[%s220 + $0x8] sm:$0xff] %vm376, %v424
        %s427 = sand.u32 %s137, 1
        %s428 = scalar_lea.sflag [#allocation3], %s427
        %s429 = sand.u32 %s137, 1
        %s430 = smul.addr %s429, 16
        %s431 = scalar_lea.vmem [#allocation2], %s430
        // Predicated region
        $region41: #{tpu_custom_call.1} parent=39 // pred_check
          %p432 = pneg %p147
        $region42: #{tpu_custom_call.1} parent=39 // pred_check_branch
          %434 = sbr.rel (%p432) target = $region44
        $region43: #{tpu_custom_call.1} parent=39 // pred_region
          %s435 = smul.u32 2, %s19
          %s437 = ssub.s32 256, 256
          %438 = vsyncadd %s428, %s437
          %s439 = smul.addr %s435, 128
          %s440 = scalar_lea.hbm %s5, %s439
          %s441 = sshll.u32 %s431, 4
          %s442 = int_to_ptr.vmem [resolvable:$true] %s441
          %447 = dma.vmem_to_hbm [thread:$0]  %s442, 256, %s440, %s428, 128, 128, 8
        $region44: #{tpu_custom_call.1} parent=39 // pred_fallthru
          _
      $region40: #{tpu_custom_call.1} parent=5 // pred_fallthru
        _
      %p448 = scmp.le.s32.totalorder 2, %s14
      // Predicated region
      $region45: #{tpu_custom_call.1} parent=5 // pred_check
        %p449 = pneg %p448
      $region46: #{tpu_custom_call.1} parent=5 // pred_check_branch
        %451 = sbr.rel (%p449) target = $region48
      $region47: #{tpu_custom_call.1} parent=5 // pred_region
        %s452 = ssub.s32 %s14, 2
        // Predicated region
        $region49: #{tpu_custom_call.1} parent=47 // pred_check
          %p453 = pneg %p153
        $region50: #{tpu_custom_call.1} parent=47 // pred_check_branch
          %455 = sbr.rel (%p453) target = $region52
        $region51: #{tpu_custom_call.1} parent=47 // pred_region
          %s456 = sand.u32 %s138, 1
          %s457 = scalar_lea.sflag [#allocation3], %s456
          %s458 = sand.u32 %s138, 1
          %s459 = smul.addr %s458, 16
          %s460 = scalar_lea.vmem [#allocation2], %s459
          %461 = dma.done %s457, 256
        $region52: #{tpu_custom_call.1} parent=47 // pred_fallthru
          _
      $region48: #{tpu_custom_call.1} parent=5 // pred_fallthru
        _
    $region6: #{tpu_custom_call.1} parent=1 // loop_footer
      %s18 = sadd.s32 1, %s14
    $region7: #{tpu_custom_call.1} parent=1 // loop_footer_branch
      %13 = sbr.rel target = $region3
    $region8: #{tpu_custom_call.1} parent=1 // loop_exit
      _
    %462 = vsyncpa [#allocation3], 1
    %s463 = scalar_lea.sflag [#allocation3], 1
    %464 = vsyncpa %s463, 1

</llo_original>
